<compile_context>
chip_gen: v7x
topology: tpu7x:2x2x1
jax: 0.10.0
libtpu: 0.0.40
codegen_flags: <defaults>
</compile_context>

<pallas_src>
import jax
import jax.numpy as jnp
from jax.experimental import pallas as pl
from jax.experimental.pallas import tpu as pltpu


def _round_up(x: int, m: int) -> int:
    return ((x + m - 1) // m) * m


def _patch_embed_kernel(p_ref, w_ref, b_ref, o_ref):
    # p_ref: (TM, K) im2col patch rows        (streaming, double-buffered)
    # w_ref: (K, E)  flattened conv weight    (grid-invariant, single-buffered)
    # b_ref: (1, E)  bias row, float32        (grid-invariant, single-buffered)
    # o_ref: (TM, E) lane-dense output tile
    y = jnp.dot(p_ref[...], w_ref[...], preferred_element_type=jnp.float32)
    o_ref[...] = (y + b_ref[...]).astype(o_ref.dtype)


def patch_embed_pallas(x, w_conv, b_conv, patch_size, *,
                       compute_dtype=None, out_dtype=None):
    """x: (B, Cin, H, W); w_conv: (E, Cin, P, P); b_conv: (E,).

    Returns (B, num_patches, E), matching the PyTorch forward.
    compute_dtype=jnp.bfloat16 casts MXU operands (accumulation stays f32,
    bias stays f32).  out_dtype overrides the output dtype (e.g. bf16).
    """
    B, Cin, H, W = x.shape
    E = w_conv.shape[0]
    P = patch_size
    # TODO(synk): nn.Conv2d silently floors the output spatial size when H/W is
    # not divisible by P; we require exact divisibility (true for standard ViT).
    if H % P or W % P:
        raise ValueError(f"H={H}, W={W} must be divisible by patch_size={P}")
    nH, nW = H // P, W // P
    n_patches = nH * nW
    K = Cin * P * P
    M = B * n_patches
    out_dtype = x.dtype if out_dtype is None else out_dtype

    # ---- im2col: pure layout, fused into the pallas_call input when jitted --
    # (B, Cin, nH, P, nW, P) -> (B, nH, nW, Cin, P, P) -> (B*n_patches, K)
    patches = (x.reshape(B, Cin, nH, P, nW, P)
                 .transpose(0, 2, 4, 1, 3, 5)
                 .reshape(M, K))
    # Conv weight (E, Cin, P, P) flattened in the same (c, kh, kw) order.
    w_mat = w_conv.reshape(E, K).T                      # (K, E)
    b_row = b_conv.reshape(1, E).astype(jnp.float32)    # bias always f32

    if compute_dtype is not None:
        patches = patches.astype(compute_dtype)
        w_mat = w_mat.astype(compute_dtype)

    # ---- pad degenerate lane dims up to 128 (toy shapes / non-128 E only) ---
    E_p = _round_up(E, 128)
    K_p = _round_up(K, 128) if K < 128 else K
    if K_p != K:
        patches = jnp.pad(patches, ((0, 0), (0, K_p - K)))
        w_mat = jnp.pad(w_mat, ((0, K_p - K), (0, 0)))
    if E_p != E:
        w_mat = jnp.pad(w_mat, ((0, 0), (0, E_p - E)))
        b_row = jnp.pad(b_row, ((0, 0), (0, E_p - E)))

    # ---- M tiling: big streaming tiles, but always >= 2 grid steps ----------
    in_bytes = jnp.dtype(patches.dtype).itemsize
    out_bytes = jnp.dtype(out_dtype).itemsize
    cap = 1024 if in_bytes <= 2 else 512            # bf16 vs f32 streaming tile
    tile_m = max(8, min(cap, _round_up(pl.cdiv(M, 2), 8)))
    grid = (pl.cdiv(M, tile_m),)

    # VMEM: double-buffered patches + output, single-buffered weight/bias.
    vmem_est = (2 * tile_m * K_p * in_bytes
                + K_p * E_p * in_bytes
                + E_p * 4
                + 2 * tile_m * E_p * out_bytes)
    vmem_limit = int(min(max(int(1.5 * vmem_est) + (8 << 20), 32 << 20),
                         56 << 20))

    out = pl.pallas_call(
        _patch_embed_kernel,
        out_shape=jax.ShapeDtypeStruct((M, E_p), out_dtype),
        grid=grid,
        in_specs=[
            # streaming patch rows
            pl.BlockSpec((tile_m, K_p), lambda m: (m, 0)),
            # grid-invariant weight / bias: single-buffered (VMEM win on v7x)
            pl.BlockSpec((K_p, E_p), lambda m: (0, 0),
                         pipeline_mode=pl.Buffered(1)),
            pl.BlockSpec((1, E_p), lambda m: (0, 0),
                         pipeline_mode=pl.Buffered(1)),
        ],
        out_specs=pl.BlockSpec((tile_m, E_p), lambda m: (m, 0)),
        compiler_params=pltpu.CompilerParams(
            dimension_semantics=("parallel",),
            allow_input_fusion=[True, False, False],
            vmem_limit_bytes=vmem_limit),
    )(patches, w_mat, b_row)

    if E_p != E:
        out = out[:, :E]
    return out.reshape(B, n_patches, E)


def patch_embed_ref(x, w_conv, b_conv, patch_size):
    """Pure-JAX reference mirroring the PyTorch forward exactly."""
    y = jax.lax.conv_general_dilated(
        x, w_conv,
        window_strides=(patch_size, patch_size),
        padding="VALID",
        dimension_numbers=("NCHW", "OIHW", "NCHW"),
        precision=jax.lax.Precision.HIGHEST)
    y = y + b_conv.reshape(1, -1, 1, 1)
    B, E, nH, nW = y.shape
    return y.reshape(B, E, nH * nW).transpose(0, 2, 1)   # flatten(2).transpose(1,2)


if __name__ == "__main__":
    # Small shapes consistent with the module: B=2, in_chans=3, img=16, P=4, E=32
    B, Cin, img, P, E = 2, 3, 16, 4, 32

    key = jax.random.PRNGKey(0)
    kx, kw, kb = jax.random.split(key, 3)
    x = jax.random.normal(kx, (B, Cin, img, img), dtype=jnp.float32)
    w_conv = 0.02 * jax.random.normal(kw, (E, Cin, P, P), dtype=jnp.float32)
    b_conv = 0.02 * jax.random.normal(kb, (E,), dtype=jnp.float32)

    ref = patch_embed_ref(x, w_conv, b_conv, P)

    pe = jax.jit(patch_embed_pallas,
                 static_argnames=("patch_size", "compute_dtype", "out_dtype"))

    # Exact-semantics run (f32 operands, f32 accumulation).
    out = jax.block_until_ready(pe(x, w_conv, b_conv, patch_size=P))
    assert out.shape == (B, (img // P) ** 2, E)
    assert jnp.allclose(out, ref, atol=1e-4, rtol=1e-4)

    # bf16 MXU operands, f32 accumulation + f32 bias (v6e/v7x MXU peak).
    out_bf16 = jax.block_until_ready(
        pe(x, w_conv, b_conv, patch_size=P, compute_dtype=jnp.bfloat16))
    assert jnp.allclose(out_bf16, ref, atol=2e-2, rtol=2e-2)

    # bf16 output path (halves output write traffic for bf16 consumers).
    out_bf16o = jax.block_until_ready(
        pe(x, w_conv, b_conv, patch_size=P,
           compute_dtype=jnp.bfloat16, out_dtype=jnp.bfloat16))
    assert out_bf16o.dtype == jnp.bfloat16
    assert jnp.allclose(out_bf16o.astype(jnp.float32), ref, atol=3e-2, rtol=3e-2)

    print("KERNEL_OK")
</pallas_src>

<mosaic_0001>
module attributes {stable_mosaic.version = 11 : i64} {
  func.func @_patch_embed_kernel(%arg0: i32, %arg1: memref<16x128xf32, #tpu.memory_space<vmem>>, %arg2: memref<128x128xf32, #tpu.memory_space<vmem>>, %arg3: memref<1x128xf32, #tpu.memory_space<vmem>>, %arg4: memref<16x128xf32, #tpu.memory_space<vmem>>) attributes {dimension_semantics = [#tpu.dimension_semantics<parallel>], iteration_bounds = array<i64: 2>, scalar_prefetch = 0 : i64, scratch_operands = 0 : i64, tpu.core_type = #tpu.core_type<tc>, window_params = [{transform_indices = @transform_0, window_bounds = array<i64: 16, 128>}, {pipeline_mode = #tpu.pipeline_mode<synchronous>, transform_indices = @transform_1, window_bounds = array<i64: 128, 128>}, {pipeline_mode = #tpu.pipeline_mode<synchronous>, transform_indices = @transform_2, window_bounds = array<i64: 1, 128>}, {transform_indices = @transform_3, window_bounds = array<i64: 16, 128>}]} {
    %c0 = arith.constant 0 : index
    %c0_0 = arith.constant 0 : index
    %0 = vector.load %arg1[%c0, %c0_0] : memref<16x128xf32, #tpu.memory_space<vmem>>, vector<16x128xf32>
    %c0_1 = arith.constant 0 : index
    %c0_2 = arith.constant 0 : index
    %1 = vector.load %arg2[%c0_1, %c0_2] : memref<128x128xf32, #tpu.memory_space<vmem>>, vector<128x128xf32>
    %cst = arith.constant dense<0.000000e+00> : vector<16x128xf32>
    %2 = tpu.matmul %0, %1, %cst {dimension_numbers = #tpu.dot_dimension_numbers<[1], [0], [0], [1], [0, 0, 1, 1], [], []>} : vector<16x128xf32>, vector<128x128xf32>, vector<16x128xf32> -> vector<16x128xf32>
    %c0_3 = arith.constant 0 : index
    %c0_4 = arith.constant 0 : index
    %3 = vector.load %arg3[%c0_3, %c0_4] : memref<1x128xf32, #tpu.memory_space<vmem>>, vector<1x128xf32>
    %4 = vector.broadcast %3 : vector<1x128xf32> to vector<16x128xf32>
    %5 = arith.addf %2, %4 : vector<16x128xf32>
    %c0_5 = arith.constant 0 : index
    %c0_6 = arith.constant 0 : index
    %6 = vector.load %arg4[%c0_5, %c0_6] : memref<16x128xf32, #tpu.memory_space<vmem>>, vector<16x128xf32>
    tpu.vector_store %arg4[%c0_5, %c0_6], %5 {strides = array<i32>} : memref<16x128xf32, #tpu.memory_space<vmem>>, vector<16x128xf32>,
    return
  }
  func.func @transform_0(%arg0: i32) -> (i32, i32) {
    %c0_i32 = arith.constant 0 : i32
    %c0_i32_0 = arith.constant 0 : i32
    return %arg0, %c0_i32 : i32, i32
  }
  func.func @transform_1(%arg0: i32) -> (i32, i32) {
    %c0_i32 = arith.constant 0 : i32
    %c0_i32_0 = arith.constant 0 : i32
    %c0_i32_1 = arith.constant 0 : i32
    return %c0_i32, %c0_i32_0 : i32, i32
  }
  func.func @transform_2(%arg0: i32) -> (i32, i32) {
    %c0_i32 = arith.constant 0 : i32
    %c0_i32_0 = arith.constant 0 : i32
    %c0_i32_1 = arith.constant 0 : i32
    return %c0_i32, %c0_i32_0 : i32, i32
  }
  func.func @transform_3(%arg0: i32) -> (i32, i32) {
    %c0_i32 = arith.constant 0 : i32
    %c0_i32_0 = arith.constant 0 : i32
    return %arg0, %c0_i32 : i32, i32
  }
}

</mosaic_0001>

<llo_original>
// kernel: patch_embed_pallas.2
$region0: #{patch_embed_pallas.2}
  #allocation0 [shape = 'u32[]', space=smem, size = 0x4, offset = 0x4, fixed_abs, tag = 'smem constant byte address 0x4 - core index']
  #allocation1 [shape = 'u32[144,128]{1,0:T(1,128)}', space=vmem, size = 0x12000, scoped, tag = 'internal scratch']
  #allocation2 [shape = 'u32[2048]{0}', space=vmem, size = 0x2000, scoped, tag = 'scoped memory for patch_embed_pallas.2']
  #allocation3 [shape = 'u32[2048]{0}', space=vmem, size = 0x2000, scoped, tag = 'scoped memory for patch_embed_pallas.2']
  #allocation4 [shape = 'u32[2048]{0}', space=vmem, size = 0x2000, scoped, tag = 'scoped memory for patch_embed_pallas.2']
  #allocation5 [shape = 'u32[2048]{0}', space=vmem, size = 0x2000, scoped, tag = 'scoped memory for patch_embed_pallas.2']
  #allocation6 [shape = 'u32[2048]{0}', space=vmem, size = 0x2000, scoped, tag = 'scoped memory for patch_embed_pallas.2']
  %s0 = inlined_call_operand.vmem [shape: f32[128,128], index: 0, kind: input, shape index: {}]
  %s1 = inlined_call_operand.vmem [shape: f32[1,128], index: 1, kind: input, shape index: {}]
  %s2 = inlined_call_operand.vmem [shape: f32[32,48], index: 2, kind: input, shape index: {}]
  %s3 = inlined_call_operand.<no memory space> [shape: f32[], index: 3, kind: input, shape index: {}]
  %s4 = inlined_call_operand.hbm [shape: f32[32,128], index: 4, kind: output, shape index: {}]
  %s5 = sld [smem:[#allocation0]]
  $region45: #{patch_embed_pallas.2} parent=0
    _
  %s7 = ssub.s32 1, %s5
  %s8 = scalar_select 0, %s7, %s5
  %v9 = vstv %s3
  $region1: #{patch_embed_pallas.2} parent=0
    #allocation7 [shape = 'u8[16384]{0}', space=vmem, size = 0x4000, scoped, tag = 'output window, operand 0']
    #allocation8 [shape = 's32[2]{0}', space=sflag, size = 0x8, scoped, tag = 'scoped memory for patch_embed_pallas.2']
    %10 = vsyncpa [#allocation8], 0
    %s11 = scalar_lea.sflag [#allocation8], 1
    %12 = vsyncpa %s11, 0
    loop: start=0, step=1, limit=4
    $region2: #{patch_embed_pallas.2} parent=1 // loop_pre_header
      _
    $region3: #{patch_embed_pallas.2} parent=1 // loop_header
      %s14 = sphi 0, %s18
      %p15 = scmp.ge.s32.totalorder %s14, 4
      %s24 = sphi 0, %s26
      %s27 = sphi 0, %s24
      %s28 = sphi 0, %s27
      %s44 = sphi 0, %s28
      %s48 = sphi 0, %s48
      %s50 = sphi 0, %s48
      %s51 = sphi 0, %s50
      %s65 = sphi 0, %s51
      %s69 = sphi 0, %s69
      %s71 = sphi 0, %s69
      %s72 = sphi 0, %s71
      %s86 = sphi 0, %s72
      %s92 = sphi 0, %s94
      %s95 = sphi 0, %s92
      %s96 = sphi 0, %s95
      %s112 = sphi 0, %s96
    $region4: #{patch_embed_pallas.2} parent=1 // loop_header_branch
      %17 = sbr.rel (%p15) target = $region8
    $region5: #{patch_embed_pallas.2} parent=1 // loop_body
      %s19 = ssub.s32 %s14, 1
      %s20 = ssub.s32 %s14, 2
      %s21 = sadd.s32 %s14, 1
      %s22 = ssub.s32 %s14, %s21
      %p23 = scmp.eq.s32.totalorder %s22, 0
      %s25 = sadd.s32 %s24, 1
      %s26 = scalar_select %p23, %s24, %s25
      %p29 = pneg %p23
      %p30 = scmp.eq.s32.totalorder %s14, 1
      %p31 = por %p29, %p30
      %p32 = scmp.ne.s32.totalorder %s24, %s27
      %p33 = scmp.eq.s32.totalorder %s14, 0
      %p34 = por %p32, %p33
      %p35 = scmp.ne.s32.totalorder %s24, %s27
      %p36 = scmp.eq.s32.totalorder %s19, 1
      %p37 = por %p35, %p36
      %p38 = scmp.ne.s32.totalorder %s27, %s28
      %p39 = scmp.eq.s32.totalorder %s19, 0
      %p40 = por %p38, %p39
      %p41 = scmp.ne.s32.totalorder %s27, %s28
      %p42 = scmp.eq.s32.totalorder %s20, 1
      %p43 = por %p41, %p42
      %p45 = scmp.ne.s32.totalorder %s28, %s44
      %p46 = scmp.eq.s32.totalorder %s20, 0
      %p47 = por %p45, %p46
      %s49 = sadd.s32 %s48, 1
      %p52 = scmp.eq.s32.totalorder %s14, 1
      %p53 = scmp.ne.s32.totalorder %s48, %s50
      %p54 = scmp.eq.s32.totalorder %s14, 0
      %p55 = por %p53, %p54
      %p56 = scmp.ne.s32.totalorder %s48, %s50
      %p57 = scmp.eq.s32.totalorder %s19, 1
      %p58 = por %p56, %p57
      %p59 = scmp.ne.s32.totalorder %s50, %s51
      %p60 = scmp.eq.s32.totalorder %s19, 0
      %p61 = por %p59, %p60
      %p62 = scmp.ne.s32.totalorder %s50, %s51
      %p63 = scmp.eq.s32.totalorder %s20, 1
      %p64 = por %p62, %p63
      %p66 = scmp.ne.s32.totalorder %s51, %s65
      %p67 = scmp.eq.s32.totalorder %s20, 0
      %p68 = por %p66, %p67
      %s70 = sadd.s32 %s69, 1
      %p73 = scmp.eq.s32.totalorder %s14, 1
      %p74 = scmp.ne.s32.totalorder %s69, %s71
      %p75 = scmp.eq.s32.totalorder %s14, 0
      %p76 = por %p74, %p75
      %p77 = scmp.ne.s32.totalorder %s69, %s71
      %p78 = scmp.eq.s32.totalorder %s19, 1
      %p79 = por %p77, %p78
      %p80 = scmp.ne.s32.totalorder %s71, %s72
      %p81 = scmp.eq.s32.totalorder %s19, 0
      %p82 = por %p80, %p81
      %p83 = scmp.ne.s32.totalorder %s71, %s72
      %p84 = scmp.eq.s32.totalorder %s20, 1
      %p85 = por %p83, %p84
      %p87 = scmp.ne.s32.totalorder %s72, %s86
      %p88 = scmp.eq.s32.totalorder %s20, 0
      %p89 = por %p87, %p88
      %s90 = ssub.s32 %s14, %s21
      %p91 = scmp.eq.s32.totalorder %s90, 0
      %s93 = sadd.s32 %s92, 1
      %s94 = scalar_select %p91, %s92, %s93
      %p97 = pneg %p91
      %p98 = scmp.eq.s32.totalorder %s14, 1
      %p99 = por %p97, %p98
      %p100 = scmp.ne.s32.totalorder %s92, %s95
      %p101 = scmp.eq.s32.totalorder %s14, 0
      %p102 = por %p100, %p101
      %p103 = scmp.ne.s32.totalorder %s92, %s95
      %p104 = scmp.eq.s32.totalorder %s19, 1
      %p105 = por %p103, %p104
      %p106 = scmp.ne.s32.totalorder %s95, %s96
      %p107 = scmp.eq.s32.totalorder %s19, 0
      %p108 = por %p106, %p107
      %p109 = scmp.ne.s32.totalorder %s95, %s96
      %p110 = scmp.eq.s32.totalorder %s20, 1
      %p111 = por %p109, %p110
      %p113 = scmp.ne.s32.totalorder %s96, %s112
      %p114 = scmp.eq.s32.totalorder %s20, 0
      %p115 = por %p113, %p114
      %p116 = scmp.le.s32.totalorder 1, %s14
      %p117 = scmp.lt.s32.totalorder %s14, 3
      %p118 = pnand %p116, %p117
      %p119 = pneg %p118
      // Predicated region
      $region9: #{patch_embed_pallas.2} parent=5 // pred_check
        _
      $region10: #{patch_embed_pallas.2} parent=5 // pred_check_branch
        %121 = sbr.rel (%p118) target = $region12
      $region11: #{patch_embed_pallas.2} parent=5 // pred_region
        %s122 = ssub.s32 %s14, 1
        // Predicated region
        $region13: #{patch_embed_pallas.2} parent=11 // pred_check
          %p123 = pneg %p61
        $region14: #{patch_embed_pallas.2} parent=11 // pred_check_branch
          %125 = sbr.rel (%p123) target = $region16
        $region15: #{patch_embed_pallas.2} parent=11 // pred_region
          _
        $region16: #{patch_embed_pallas.2} parent=11 // pred_fallthru
          _
        // Predicated region
        $region17: #{patch_embed_pallas.2} parent=11 // pred_check
          %p126 = pneg %p82
        $region18: #{patch_embed_pallas.2} parent=11 // pred_check_branch
          %128 = sbr.rel (%p126) target = $region20
        $region19: #{patch_embed_pallas.2} parent=11 // pred_region
          _
        $region20: #{patch_embed_pallas.2} parent=11 // pred_fallthru
          _
      $region12: #{patch_embed_pallas.2} parent=5 // pred_fallthru
        _
      %p129 = scmp.lt.s32.totalorder %s14, 2
      // Predicated region
      $region21: #{patch_embed_pallas.2} parent=5 // pred_check
        %p130 = pneg %p129
      $region22: #{patch_embed_pallas.2} parent=5 // pred_check_branch
        %132 = sbr.rel (%p130) target = $region24
      $region23: #{patch_embed_pallas.2} parent=5 // pred_region
        // Predicated region
        $region25: #{patch_embed_pallas.2} parent=23 // pred_check
          %p133 = pneg %p34
        $region26: #{patch_embed_pallas.2} parent=23 // pred_check_branch
          %135 = sbr.rel (%p133) target = $region28
        $region27: #{patch_embed_pallas.2} parent=23 // pred_region
          %s136 = smul.u32 2, %s14
          %p137 = scmp.lt.s32.totalorder %s136, 3
          %s138 = scalar_select %p137, %s136, 3
          %s139 = smul.addr %s138, 8
          %s140 = scalar_lea.vmem %s2, %s139
          %s141 = smul.u32 2, %s14
        $region28: #{patch_embed_pallas.2} parent=23 // pred_fallthru
          _
      $region24: #{patch_embed_pallas.2} parent=5 // pred_fallthru
        _
      %p142 = scmp.le.s32.totalorder 1, %s14
      %p143 = scmp.lt.s32.totalorder %s14, 3
      %p144 = pnand %p142, %p143
      %p145 = pneg %p144
      // Predicated region
      $region29: #{patch_embed_pallas.2} parent=5 // pred_check
        _
      $region30: #{patch_embed_pallas.2} parent=5 // pred_check_branch
        %147 = sbr.rel (%p144) target = $region32
      $region31: #{patch_embed_pallas.2} parent=5 // pred_region
        #allocation9 [shape = 'u8[8192]{0}', space=vmem, size = 0x2000, dematerialized = true, scoped, tag = 'FusionAdapter Buffer %fusion.1 = f32[32,128]{1,0:T(8,128)} fusion(%param_2.1, %param_3), kind=kLoop, calls=%fused_computation.2.clone, metadata={op_name="jit(patch_embed_pallas)/jit(_pad)/pad" stack_frame_id=12}']
        %s148 = ssub.s32 %s14, 1
        %s149 = smul.u32 2, %s19
        %p150 = scmp.lt.s32.totalorder %s149, 3
        %s151 = scalar_select %p150, %s149, 3
        %s152 = smul.addr %s151, 8
        %s153 = scalar_lea.vmem %s2, %s152
        %p154 = pneg %p40
        %p155 = pneg %p37
        %p156 = pneg %p61
        %p157 = pneg %p58
        %p158 = pneg %p82
        %p159 = pneg %p79
        %p160 = pneg %p108
        %p161 = pneg %p105
        %s162 = sand.u32 %s95, 1
        %s163 = scalar_lea.sflag [#allocation8], %s162
        %s164 = sand.u32 %s95, 1
        %s165 = smul.addr %s164, 16
        %s166 = scalar_lea.vmem [#allocation7], %s165
        %s167 = smul.u32 2, %s19
        %p168 = scmp.lt.s32.totalorder %s167, 3
        %s169 = scalar_select %p168, %s167, 3
        %s170 = smul.addr %s169, 8
        %s171 = scalar_lea.vmem %s2, %s170
        %s172 = smul.u32 2, %s19
        %s173 = smul.u32 2, %s19
        %v174 = vld [vmem:[%s171] sm:$0xff]
        %v175 = vlaneseq
        %v176 = vand.u32 %v175, 127
        %vm178 = vcmp.lt.s32.totalorder %v176, 48
        %v179 = vsel %vm178, %v174, %v9
        %181 = vst [vmem:[#allocation9] sm:$0xff] %v179
        %s182 = scalar_lea.vmem %s171, 8
        %v183 = vld [vmem:[%s182] sm:$0xff]
        %v184 = vlaneseq
        %v185 = vand.u32 %v184, 127
        %vm187 = vcmp.lt.s32.totalorder %v185, 48
        %v188 = vsel %vm187, %v183, %v9
        %s189 = scalar_lea.vmem [#allocation9], 8
        %191 = vst [vmem:[%s189] sm:$0xff] %v188
        %v192 = vld [vmem:[#allocation9] sm:$0xff]
        %v193 = vld [vmem:[#allocation9 + $0x8] sm:$0xff]
        %v194 = vld [vmem:[%s0] sm:$0xff]
        %v195 = vld [vmem:[%s0 + $0x8] sm:$0xff]
        %v196 = vld [vmem:[%s0 + $0x10] sm:$0xff]
        %v197 = vld [vmem:[%s0 + $0x18] sm:$0xff]
        %v198 = vld [vmem:[%s0 + $0x20] sm:$0xff]
        %v199 = vld [vmem:[%s0 + $0x28] sm:$0xff]
        %v200 = vld [vmem:[%s0 + $0x30] sm:$0xff]
        %v201 = vld [vmem:[%s0 + $0x38] sm:$0xff]
        %v202 = vld [vmem:[%s0 + $0x40] sm:$0xff]
        %v203 = vld [vmem:[%s0 + $0x48] sm:$0xff]
        %v204 = vld [vmem:[%s0 + $0x50] sm:$0xff]
        %v205 = vld [vmem:[%s0 + $0x58] sm:$0xff]
        %v206 = vld [vmem:[%s0 + $0x60] sm:$0xff]
        %v207 = vld [vmem:[%s0 + $0x68] sm:$0xff]
        %v208 = vld [vmem:[%s0 + $0x70] sm:$0xff]
        %v209 = vld [vmem:[%s0 + $0x78] sm:$0xff]
        %v210 = vld [vmem:[%s1] sm:$0x1]
        %v212 = vlaneseq
        %v213 = vshrl.u32 %v212, 7
        %v214 = vsub.s32 0, %v213
        %v215 = vrot.slane %v210, %v214
        %217 = vmatprep.subr.mxu0 0.0
        %218 = vmatpush1.msra.mxu0 %v194
        %219 = vmatprep.subr.mxu0 0.0
        %220 = vmatpush1.msra.mxu0 %v195
        %221 = vmatprep.subr.mxu0 0.0
        %222 = vmatpush1.msra.mxu0 %v196
        %223 = vmatprep.subr.mxu0 0.0
        %224 = vmatpush1.msra.mxu0 %v197
        %225 = vmatprep.subr.mxu0 0.0
        %226 = vmatpush1.msra.mxu0 %v198
        %227 = vmatprep.subr.mxu0 0.0
        %228 = vmatpush1.msra.mxu0 %v199
        %229 = vmatprep.subr.mxu0 0.0
        %230 = vmatpush1.msra.mxu0 %v200
        %231 = vmatprep.subr.mxu0 0.0
        %232 = vmatpush1.msra.mxu0 %v201
        %233 = vmatprep.subr.mxu0 0.0
        %234 = vmatpush1.msra.mxu0 %v202
        %235 = vmatprep.subr.mxu0 0.0
        %236 = vmatpush1.msra.mxu0 %v203
        %237 = vmatprep.subr.mxu0 0.0
        %238 = vmatpush1.msra.mxu0 %v204
        %239 = vmatprep.subr.mxu0 0.0
        %240 = vmatpush1.msra.mxu0 %v205
        %241 = vmatprep.subr.mxu0 0.0
        %242 = vmatpush1.msra.mxu0 %v206
        %243 = vmatprep.subr.mxu0 0.0
        %244 = vmatpush1.msra.mxu0 %v207
        %245 = vmatprep.subr.mxu0 0.0
        %246 = vmatpush1.msra.mxu0 %v208
        %247 = vmatprep.subr.mxu0 0.0
        %248 = vmatpush1.msra.mxu0 %v209
        %249 = vmatprep.subr.mxu0 0.0
        %250 = vmatpush1.msra.mxu0 0.0
        %251 = vmatprep.subr.mxu0 0.0
        %252 = vmatpush1.msra.mxu0 0.0
        %253 = vmatprep.subr.mxu0 0.0
        %254 = vmatpush1.msra.mxu0 0.0
        %255 = vmatprep.subr.mxu0 0.0
        %256 = vmatpush1.msra.mxu0 0.0
        %257 = vmatprep.subr.mxu0 0.0
        %258 = vmatpush1.msra.mxu0 0.0
        %259 = vmatprep.subr.mxu0 0.0
        %260 = vmatpush1.msra.mxu0 0.0
        %261 = vmatprep.subr.mxu0 0.0
        %262 = vmatpush1.msra.mxu0 0.0
        %263 = vmatprep.subr.mxu0 0.0
        %264 = vmatpush1.msra.mxu0 0.0
        %265 = vmatprep.subr.mxu0 0.0
        %266 = vmatpush1.msra.mxu0 0.0
        %267 = vmatprep.subr.mxu0 0.0
        %268 = vmatpush1.msra.mxu0 0.0
        %269 = vmatprep.subr.mxu0 0.0
        %270 = vmatpush1.msra.mxu0 0.0
        %271 = vmatprep.subr.mxu0 0.0
        %272 = vmatpush1.msra.mxu0 0.0
        %273 = vmatprep.subr.mxu0 0.0
        %274 = vmatpush1.msra.mxu0 0.0
        %275 = vmatprep.subr.mxu0 0.0
        %276 = vmatpush1.msra.mxu0 0.0
        %277 = vmatprep.subr.mxu0 0.0
        %278 = vmatpush1.msra.mxu0 0.0
        %279 = vmatprep.subr.mxu0 0.0
        %280 = vmatpush1.msra.mxu0 0.0
        %281 = vmatprep.mubr.f32.mxu0 0.0
        %282 = vmatmul.mubr.f32.gmra.mrb[0].mxu0 %v192
        %v283 = vpop.f32.mrb[0].mxu0
        %v284 = vadd.f32 %v215, %v283
        %v285 = vpop.f32.mrb[0].mxu0
        %286 = vmatprep.mubr.f32.mxu0 0.0
        %287 = vmatmul.mubr.f32.gmra.mrb[0].mxu0 %v193
        %v288 = vpop.f32.mrb[0].mxu0
        %v289 = vadd.f32 %v215, %v288
        %v290 = vpop.f32.mrb[0].mxu0
        %291 = vdwg.mxu0
        %292 = vst [vmem:[%s166] sm:$0xff] %v284
        %293 = vst [vmem:[%s166 + $0x8] sm:$0xff] %v289
        %s294 = sand.u32 %s95, 1
        %s295 = scalar_lea.sflag [#allocation8], %s294
        %s296 = sand.u32 %s95, 1
        %s297 = smul.addr %s296, 16
        %s298 = scalar_lea.vmem [#allocation7], %s297
        // Predicated region
        $region33: #{patch_embed_pallas.2} parent=31 // pred_check
          %p299 = pneg %p105
        $region34: #{patch_embed_pallas.2} parent=31 // pred_check_branch
          %301 = sbr.rel (%p299) target = $region36
        $region35: #{patch_embed_pallas.2} parent=31 // pred_region
          %s302 = smul.u32 2, %s19
          %s304 = ssub.s32 256, 256
          %305 = vsyncadd %s295, %s304
          %s306 = smul.addr %s302, 128
          %s307 = scalar_lea.hbm %s4, %s306
          %s308 = sshll.u32 %s298, 4
          %s309 = int_to_ptr.vmem [resolvable:$true] %s308
          %314 = dma.vmem_to_hbm [thread:$0]  %s309, 256, %s307, %s295, 128, 128, 8
        $region36: #{patch_embed_pallas.2} parent=31 // pred_fallthru
          _
      $region32: #{patch_embed_pallas.2} parent=5 // pred_fallthru
        _
      %p315 = scmp.le.s32.totalorder 2, %s14
      // Predicated region
      $region37: #{patch_embed_pallas.2} parent=5 // pred_check
        %p316 = pneg %p315
      $region38: #{patch_embed_pallas.2} parent=5 // pred_check_branch
        %318 = sbr.rel (%p316) target = $region40
      $region39: #{patch_embed_pallas.2} parent=5 // pred_region
        %s319 = ssub.s32 %s14, 2
        // Predicated region
        $region41: #{patch_embed_pallas.2} parent=39 // pred_check
          %p320 = pneg %p111
        $region42: #{patch_embed_pallas.2} parent=39 // pred_check_branch
          %322 = sbr.rel (%p320) target = $region44
        $region43: #{patch_embed_pallas.2} parent=39 // pred_region
          %s323 = sand.u32 %s96, 1
          %s324 = scalar_lea.sflag [#allocation8], %s323
          %s325 = sand.u32 %s96, 1
          %s326 = smul.addr %s325, 16
          %s327 = scalar_lea.vmem [#allocation7], %s326
          %328 = dma.done %s324, 256
        $region44: #{patch_embed_pallas.2} parent=39 // pred_fallthru
          _
      $region40: #{patch_embed_pallas.2} parent=5 // pred_fallthru
        _
    $region6: #{patch_embed_pallas.2} parent=1 // loop_footer
      %s18 = sadd.s32 1, %s14
    $region7: #{patch_embed_pallas.2} parent=1 // loop_footer_branch
      %13 = sbr.rel target = $region3
    $region8: #{patch_embed_pallas.2} parent=1 // loop_exit
      _
    %329 = vsyncpa [#allocation8], 1
    %s330 = scalar_lea.sflag [#allocation8], 1
    %331 = vsyncpa %s330, 1

</llo_original>
